<compile_context>
chip_gen: v6e
topology: v6e:2x2x1
jax: 0.10.0
libtpu: 0.0.40
codegen_flags: <defaults>
</compile_context>

<pallas_src>
import functools

import jax
import jax.numpy as jnp
from jax import lax
from jax.experimental import pallas as pl
from jax.experimental.pallas import tpu as pltpu

LAYER_NORM_EPS = 1e-12

# small shapes consistent with the module's forward (intermediate = 4 * hidden)
BATCH = 2
SEQ = 8
HIDDEN = 32
INTERMEDIATE = 128


def _bert_output_kernel(x_ref, w_ref, res_ref, b_ref, g_ref, beta_ref, o_ref,
                        *, eps):
    # dense: (tm, I) bf16 @ (I, H) bf16 -> (tm, H) f32 (f32 MXU accumulation).
    y = jnp.dot(x_ref[...], w_ref[...], preferred_element_type=jnp.float32)
    # TODO(synk): dropout is identity (inference/eval); training-mode dropout
    # would need pltpu.prng_seed / prng_random_bits masking here.
    y = y + b_ref[...] + res_ref[...].astype(jnp.float32)
    # LayerNorm epilogue, fully in f32 (two-pass centered variance for
    # robustness; rsqrt goes to the EUP slot).
    mean = jnp.mean(y, axis=-1, keepdims=True)
    cen = y - mean
    var = jnp.mean(cen * cen, axis=-1, keepdims=True)
    inv = lax.rsqrt(var + eps)
    o_ref[...] = (cen * inv * g_ref[...] + beta_ref[...]).astype(o_ref.dtype)


def prepare_params(weight, bias, gamma, beta):
    """One-time parameter prep (do at load time, NOT per forward call):
    transpose (H, I) -> (I, H) and cast the weight to bf16 for the MXU."""
    H = weight.shape[0]
    return dict(
        w_t=jnp.transpose(weight).astype(jnp.bfloat16),      # (I, H)
        bias=bias.reshape(1, H).astype(jnp.float32),
        gamma=gamma.reshape(1, H).astype(jnp.float32),
        beta=beta.reshape(1, H).astype(jnp.float32),
    )


def bert_output(hidden_states, input_tensor, params, *,
                eps=LAYER_NORM_EPS, tm=512):
    B, S, I = hidden_states.shape
    H = input_tensor.shape[-1]
    N = B * S

    # MXU inputs in bf16 (f32 matmul is emulated multi-pass bf16 on TPU);
    # accumulation and the LayerNorm epilogue stay f32 inside the kernel.
    x = hidden_states.reshape(N, I).astype(jnp.bfloat16)
    res = input_tensor.reshape(N, H)       # native dtype; upcast in epilogue
    w_t = params["w_t"]                    # (I, H) bf16, prepped once

    # Token-tile size: big tiles amortize per-step overhead; sublane-align and
    # zero-pad the token count so arbitrary B*S works (padded rows sliced off).
    tm_eff = min(tm, N)
    tm_eff = ((tm_eff + 7) // 8) * 8
    n_pad = pl.cdiv(N, tm_eff) * tm_eff
    if n_pad != N:
        x = jnp.pad(x, ((0, n_pad - N), (0, 0)))
        res = jnp.pad(res, ((0, n_pad - N), (0, 0)))

    grid = (n_pad // tm_eff,)

    # Whole-array VMEM residents: weight (fetched once), bias, gamma, beta.
    resident = pl.BlockSpec(memory_space=pltpu.MemorySpace.VMEM)

    # Derived VMEM budget (x2 headroom), capped well below v7x's 64 MiB/TC.
    vmem_bytes = (
        2 * tm_eff * I * x.dtype.itemsize        # double-buffered activations
        + 2 * tm_eff * H * res.dtype.itemsize    # double-buffered residual
        + 2 * tm_eff * H * 4                     # double-buffered f32 output
        + I * H * w_t.dtype.itemsize             # resident weight
        + 3 * H * 4)                             # bias / gamma / beta
    vmem_limit = int(min(max(2 * vmem_bytes, 4 << 20), 48 << 20))

    grid_spec = pltpu.PrefetchScalarGridSpec(
        num_scalar_prefetch=0,
        grid=grid,
        in_specs=[
            pl.BlockSpec((tm_eff, I), lambda i: (i, 0)),   # activation tile
            resident,                                      # weight (I, H)
            pl.BlockSpec((tm_eff, H), lambda i: (i, 0)),   # residual tile
            resident,                                      # bias   (1, H)
            resident,                                      # gamma  (1, H)
            resident,                                      # beta   (1, H)
        ],
        out_specs=pl.BlockSpec((tm_eff, H), lambda i: (i, 0)),
    )

    out = pl.pallas_call(
        functools.partial(_bert_output_kernel, eps=eps),
        out_shape=jax.ShapeDtypeStruct((n_pad, H), jnp.float32),
        grid_spec=grid_spec,
        compiler_params=pltpu.CompilerParams(
            dimension_semantics=("parallel",),
            vmem_limit_bytes=vmem_limit),
    )(x, w_t, res, params["bias"], params["gamma"], params["beta"])

    return out[:N].reshape(B, S, H)


def _reference(hidden_states, input_tensor, weight, bias, gamma, beta,
               eps=LAYER_NORM_EPS):
    y = jnp.einsum("bsi,hi->bsh", hidden_states, weight) + bias
    y = y + input_tensor
    mean = jnp.mean(y, axis=-1, keepdims=True)
    var = jnp.mean((y - mean) ** 2, axis=-1, keepdims=True)
    return (y - mean) / jnp.sqrt(var + eps) * gamma + beta


if __name__ == "__main__":
    key = jax.random.PRNGKey(0)
    k_x, k_r, k_w, k_b = jax.random.split(key, 4)

    hidden_states = jax.random.normal(k_x, (BATCH, SEQ, INTERMEDIATE),
                                      dtype=jnp.float32)
    input_tensor = jax.random.normal(k_r, (BATCH, SEQ, HIDDEN),
                                     dtype=jnp.float32)
    weight = 0.02 * jax.random.normal(k_w, (HIDDEN, INTERMEDIATE),
                                      dtype=jnp.float32)
    bias = 0.02 * jax.random.normal(k_b, (HIDDEN,), dtype=jnp.float32)
    gamma = jnp.ones((HIDDEN,), jnp.float32)
    beta = jnp.zeros((HIDDEN,), jnp.float32)

    params = prepare_params(weight, bias, gamma, beta)   # once, at "load time"

    out = bert_output(hidden_states, input_tensor, params)
    out = jax.block_until_ready(out)
    assert out.shape == (BATCH, SEQ, HIDDEN)

    # Tight check against a bf16-input-consistent reference (same rounding of
    # x / W as the kernel, f32 math elsewhere).
    hs_bf = hidden_states.astype(jnp.bfloat16).astype(jnp.float32)
    w_bf = weight.astype(jnp.bfloat16).astype(jnp.float32)
    ref_bf16 = _reference(hs_bf, input_tensor, w_bf, bias, gamma, beta)
    assert jnp.allclose(out, ref_bf16, rtol=1e-3, atol=1e-3), \
        float(jnp.max(jnp.abs(out - ref_bf16)))

    # Loose check against the pure-f32 reference (bf16 MXU inputs).
    ref_f32 = _reference(hidden_states, input_tensor, weight, bias, gamma, beta)
    assert jnp.allclose(out, ref_f32, rtol=5e-2, atol=5e-2), \
        float(jnp.max(jnp.abs(out - ref_f32)))

    print("KERNEL_OK")
</pallas_src>

<mosaic_0001>
module attributes {stable_mosaic.version = 11 : i64} {
  func.func @_bert_output_kernel(%arg0: i32, %arg1: memref<16x128xbf16, #tpu.memory_space<vmem>>, %arg2: memref<128x32xbf16, #tpu.memory_space<vmem>>, %arg3: memref<16x32xf32, #tpu.memory_space<vmem>>, %arg4: memref<1x32xf32, #tpu.memory_space<vmem>>, %arg5: memref<1x32xf32, #tpu.memory_space<vmem>>, %arg6: memref<1x32xf32, #tpu.memory_space<vmem>>, %arg7: memref<16x32xf32, #tpu.memory_space<vmem>>) attributes {dimension_semantics = [#tpu.dimension_semantics<parallel>], iteration_bounds = array<i64: 1>, scalar_prefetch = 0 : i64, scratch_operands = 0 : i64, tpu.core_type = #tpu.core_type<tc>, window_params = [{transform_indices = @transform_0, window_bounds = array<i64: 16, 128>}, {pipeline_mode = #tpu.pipeline_mode<synchronous>, transform_indices = @transform_1, window_bounds = array<i64: 128, 32>}, {transform_indices = @transform_2, window_bounds = array<i64: 16, 32>}, {pipeline_mode = #tpu.pipeline_mode<synchronous>, transform_indices = @transform_3, window_bounds = array<i64: 1, 32>}, {pipeline_mode = #tpu.pipeline_mode<synchronous>, transform_indices = @transform_4, window_bounds = array<i64: 1, 32>}, {pipeline_mode = #tpu.pipeline_mode<synchronous>, transform_indices = @transform_5, window_bounds = array<i64: 1, 32>}, {transform_indices = @transform_6, window_bounds = array<i64: 16, 32>}]} {
    %c0 = arith.constant 0 : index
    %c0_0 = arith.constant 0 : index
    %0 = vector.load %arg1[%c0, %c0_0] : memref<16x128xbf16, #tpu.memory_space<vmem>>, vector<16x128xbf16>
    %c0_1 = arith.constant 0 : index
    %c0_2 = arith.constant 0 : index
    %1 = vector.load %arg2[%c0_1, %c0_2] : memref<128x32xbf16, #tpu.memory_space<vmem>>, vector<128x32xbf16>
    %cst = arith.constant dense<0.000000e+00> : vector<16x32xf32>
    %2 = tpu.matmul %0, %1, %cst {dimension_numbers = #tpu.dot_dimension_numbers<[1], [0], [0], [1], [0, 0, 1, 1], [], []>} : vector<16x128xbf16>, vector<128x32xbf16>, vector<16x32xf32> -> vector<16x32xf32>
    %c0_3 = arith.constant 0 : index
    %c0_4 = arith.constant 0 : index
    %3 = vector.load %arg4[%c0_3, %c0_4] : memref<1x32xf32, #tpu.memory_space<vmem>>, vector<1x32xf32>
    %4 = vector.broadcast %3 : vector<1x32xf32> to vector<16x32xf32>
    %5 = arith.addf %2, %4 : vector<16x32xf32>
    %c0_5 = arith.constant 0 : index
    %c0_6 = arith.constant 0 : index
    %6 = vector.load %arg3[%c0_5, %c0_6] : memref<16x32xf32, #tpu.memory_space<vmem>>, vector<16x32xf32>
    %7 = arith.addf %5, %6 : vector<16x32xf32>
    %cst_7 = arith.constant dense<0.000000e+00> : vector<16xf32>
    %8 = vector.multi_reduction <add>, %7, %cst_7 [1] : vector<16x32xf32> to vector<16xf32>
    %9 = vector.shape_cast %8 : vector<16xf32> to vector<16x1xf32>
    %cst_8 = arith.constant 3.200000e+01 : f32
    %10 = vector.broadcast %cst_8 : f32 to vector<16x1xf32>
    %11 = arith.divf %9, %10 : vector<16x1xf32>
    %12 = vector.broadcast %11 : vector<16x1xf32> to vector<16x32xf32>
    %13 = arith.subf %7, %12 : vector<16x32xf32>
    %14 = arith.mulf %13, %13 : vector<16x32xf32>
    %cst_9 = arith.constant dense<0.000000e+00> : vector<16xf32>
    %15 = vector.multi_reduction <add>, %14, %cst_9 [1] : vector<16x32xf32> to vector<16xf32>
    %16 = vector.shape_cast %15 : vector<16xf32> to vector<16x1xf32>
    %cst_10 = arith.constant 3.200000e+01 : f32
    %17 = vector.broadcast %cst_10 : f32 to vector<16x1xf32>
    %18 = arith.divf %16, %17 : vector<16x1xf32>
    %cst_11 = arith.constant 9.99999996E-13 : f32
    %19 = vector.broadcast %cst_11 : f32 to vector<16x1xf32>
    %20 = arith.addf %18, %19 : vector<16x1xf32>
    %21 = math.rsqrt %20 : vector<16x1xf32>
    %22 = vector.broadcast %21 : vector<16x1xf32> to vector<16x32xf32>
    %23 = arith.mulf %13, %22 : vector<16x32xf32>
    %c0_12 = arith.constant 0 : index
    %c0_13 = arith.constant 0 : index
    %24 = vector.load %arg5[%c0_12, %c0_13] : memref<1x32xf32, #tpu.memory_space<vmem>>, vector<1x32xf32>
    %25 = vector.broadcast %24 : vector<1x32xf32> to vector<16x32xf32>
    %26 = arith.mulf %23, %25 : vector<16x32xf32>
    %c0_14 = arith.constant 0 : index
    %c0_15 = arith.constant 0 : index
    %27 = vector.load %arg6[%c0_14, %c0_15] : memref<1x32xf32, #tpu.memory_space<vmem>>, vector<1x32xf32>
    %28 = vector.broadcast %27 : vector<1x32xf32> to vector<16x32xf32>
    %29 = arith.addf %26, %28 : vector<16x32xf32>
    %c0_16 = arith.constant 0 : index
    %c0_17 = arith.constant 0 : index
    %30 = vector.load %arg7[%c0_16, %c0_17] : memref<16x32xf32, #tpu.memory_space<vmem>>, vector<16x32xf32>
    tpu.vector_store %arg7[%c0_16, %c0_17], %29 {strides = array<i32>} : memref<16x32xf32, #tpu.memory_space<vmem>>, vector<16x32xf32>,
    return
  }
  func.func @transform_0(%arg0: i32) -> (i32, i32) {
    %c0_i32 = arith.constant 0 : i32
    %c0_i32_0 = arith.constant 0 : i32
    return %arg0, %c0_i32 : i32, i32
  }
  func.func @transform_1(%arg0: i32) -> (i32, i32) {
    %c0_i32 = arith.constant 0 : i32
    %c0_i32_0 = arith.constant 0 : i32
    %c0_i32_1 = arith.constant 0 : i32
    return %c0_i32, %c0_i32_0 : i32, i32
  }
  func.func @transform_2(%arg0: i32) -> (i32, i32) {
    %c0_i32 = arith.constant 0 : i32
    %c0_i32_0 = arith.constant 0 : i32
    return %arg0, %c0_i32 : i32, i32
  }
  func.func @transform_3(%arg0: i32) -> (i32, i32) {
    %c0_i32 = arith.constant 0 : i32
    %c0_i32_0 = arith.constant 0 : i32
    %c0_i32_1 = arith.constant 0 : i32
    return %c0_i32, %c0_i32_0 : i32, i32
  }
  func.func @transform_4(%arg0: i32) -> (i32, i32) {
    %c0_i32 = arith.constant 0 : i32
    %c0_i32_0 = arith.constant 0 : i32
    %c0_i32_1 = arith.constant 0 : i32
    return %c0_i32, %c0_i32_0 : i32, i32
  }
  func.func @transform_5(%arg0: i32) -> (i32, i32) {
    %c0_i32 = arith.constant 0 : i32
    %c0_i32_0 = arith.constant 0 : i32
    %c0_i32_1 = arith.constant 0 : i32
    return %c0_i32, %c0_i32_0 : i32, i32
  }
  func.func @transform_6(%arg0: i32) -> (i32, i32) {
    %c0_i32 = arith.constant 0 : i32
    %c0_i32_0 = arith.constant 0 : i32
    return %arg0, %c0_i32 : i32, i32
  }
}

</mosaic_0001>

<llo_original>
// kernel: tpu_custom_call.1
$region0: #{tpu_custom_call.1}
  #allocation0 [shape = 'u32[]', space=smem, size = 0x4, offset = 0x4, fixed_abs, tag = 'smem constant byte address 0x4 - core index']
  #allocation1 [shape = 'u32[144,128]{1,0:T(1,128)}', space=vmem, size = 0x12000, scoped, tag = 'internal scratch']
  %s0 = inlined_call_operand.vmem [shape: bf16[16,128], index: 0, kind: input, shape index: {}]
  %s1 = inlined_call_operand.vmem [shape: bf16[128,32], index: 1, kind: input, shape index: {}]
  %s2 = inlined_call_operand.vmem [shape: f32[16,32], index: 2, kind: input, shape index: {}]
  %s3 = inlined_call_operand.vmem [shape: f32[1,32], index: 3, kind: input, shape index: {}]
  %s4 = inlined_call_operand.vmem [shape: f32[1,32], index: 4, kind: input, shape index: {}]
  %s5 = inlined_call_operand.vmem [shape: f32[1,32], index: 5, kind: input, shape index: {}]
  %s6 = inlined_call_operand.hbm [shape: f32[16,32], index: 6, kind: output, shape index: {}]
  %s7 = sld [smem:[#allocation0]]
  $region34: #{tpu_custom_call.1} parent=0
    _
  %s9 = ssub.s32 1, %s7
  %s10 = scalar_select 0, %s9, %s7
  $region1: #{tpu_custom_call.1} parent=0
    #allocation2 [shape = 'u8[8192]{0}', space=vmem, size = 0x2000, scoped, tag = 'output window, operand 0, single buffered']
    #allocation3 [shape = 's32[1]{0}', space=sflag, size = 0x4, scoped, tag = 'scoped memory for tpu_custom_call.1']
    %11 = vsyncpa [#allocation3], 0
    // Predicated region
    $region2: #{tpu_custom_call.1} parent=1 // pred_check
      _
    $region3: #{tpu_custom_call.1} parent=1 // pred_check_branch
      %13 = sbr.rel (0) target = $region5
    $region4: #{tpu_custom_call.1} parent=1 // pred_region
      _
    $region5: #{tpu_custom_call.1} parent=1 // pred_fallthru
      _
    // Predicated region
    $region6: #{tpu_custom_call.1} parent=1 // pred_check
      _
    $region7: #{tpu_custom_call.1} parent=1 // pred_check_branch
      %15 = sbr.rel (0) target = $region9
    $region8: #{tpu_custom_call.1} parent=1 // pred_region
      _
    $region9: #{tpu_custom_call.1} parent=1 // pred_fallthru
      _
    // Predicated region
    $region10: #{tpu_custom_call.1} parent=1 // pred_check
      _
    $region11: #{tpu_custom_call.1} parent=1 // pred_check_branch
      %17 = sbr.rel (0) target = $region13
    $region12: #{tpu_custom_call.1} parent=1 // pred_region
      _
    $region13: #{tpu_custom_call.1} parent=1 // pred_fallthru
      _
    // Predicated region
    $region14: #{tpu_custom_call.1} parent=1 // pred_check
      _
    $region15: #{tpu_custom_call.1} parent=1 // pred_check_branch
      %19 = sbr.rel (0) target = $region17
    $region16: #{tpu_custom_call.1} parent=1 // pred_region
      _
    $region17: #{tpu_custom_call.1} parent=1 // pred_fallthru
      _
    // Predicated region
    $region18: #{tpu_custom_call.1} parent=1 // pred_check
      _
    $region19: #{tpu_custom_call.1} parent=1 // pred_check_branch
      %21 = sbr.rel (0) target = $region21
    $region20: #{tpu_custom_call.1} parent=1 // pred_region
      _
    $region21: #{tpu_custom_call.1} parent=1 // pred_fallthru
      _
    // Predicated region
    $region22: #{tpu_custom_call.1} parent=1 // pred_check
      _
    $region23: #{tpu_custom_call.1} parent=1 // pred_check_branch
      %23 = sbr.rel (0) target = $region25
    $region24: #{tpu_custom_call.1} parent=1 // pred_region
      _
    $region25: #{tpu_custom_call.1} parent=1 // pred_fallthru
      _
    %v25 = vld [vmem:[%s0] sm:$0xf]
    %v26 = vld [vmem:[%s0 + $0x4] sm:$0xf]
    %v27 = vld [vmem:[%s1] sm:$0xf]
    %v28 = vld [vmem:[%s1 + $0x4] sm:$0xf]
    %v29 = vld [vmem:[%s1 + $0x8] sm:$0xf]
    %v30 = vld [vmem:[%s1 + $0xc] sm:$0xf]
    %v31 = vld [vmem:[%s1 + $0x10] sm:$0xf]
    %v32 = vld [vmem:[%s1 + $0x14] sm:$0xf]
    %v33 = vld [vmem:[%s1 + $0x18] sm:$0xf]
    %v34 = vld [vmem:[%s1 + $0x1c] sm:$0xf]
    %v35 = vld [vmem:[%s1 + $0x20] sm:$0xf]
    %v36 = vld [vmem:[%s1 + $0x24] sm:$0xf]
    %v37 = vld [vmem:[%s1 + $0x28] sm:$0xf]
    %v38 = vld [vmem:[%s1 + $0x2c] sm:$0xf]
    %v39 = vld [vmem:[%s1 + $0x30] sm:$0xf]
    %v40 = vld [vmem:[%s1 + $0x34] sm:$0xf]
    %v41 = vld [vmem:[%s1 + $0x38] sm:$0xf]
    %v42 = vld [vmem:[%s1 + $0x3c] sm:$0xf]
    %v43 = vld [vmem:[%s3] sm:$0x1]
    %v45 = vlaneseq
    %v46 = vshrl.u32 %v45, 7
    %v47 = vsub.s32 0, %v46
    %v48 = vrot.slane %v43, %v47
    %v52 = vunpack.c.l.b16 %v25
    %v53 = vunpack.c.l.b16 %v26
    %v54 = vpack.c.b16 %v53, %v52
    %v72 = vunpack.c.l.b16 %v27
    %v73 = vunpack.c.l.b16 %v28
    %v74 = vunpack.c.l.b16 %v29
    %v75 = vunpack.c.l.b16 %v30
    %v76 = vunpack.c.l.b16 %v31
    %v77 = vunpack.c.l.b16 %v32
    %v78 = vunpack.c.l.b16 %v33
    %v79 = vunpack.c.l.b16 %v34
    %v80 = vunpack.c.l.b16 %v35
    %v81 = vunpack.c.l.b16 %v36
    %v82 = vunpack.c.l.b16 %v37
    %v83 = vunpack.c.l.b16 %v38
    %v84 = vunpack.c.l.b16 %v39
    %v85 = vunpack.c.l.b16 %v40
    %v86 = vunpack.c.l.b16 %v41
    %v87 = vunpack.c.l.b16 %v42
    %v88 = vpack.c.b16 %v73, %v72
    %v89 = vpack.c.b16 %v75, %v74
    %v90 = vpack.c.b16 %v77, %v76
    %v91 = vpack.c.b16 %v79, %v78
    %v92 = vpack.c.b16 %v81, %v80
    %v93 = vpack.c.b16 %v83, %v82
    %v94 = vpack.c.b16 %v85, %v84
    %v95 = vpack.c.b16 %v87, %v86
    %104 = vmatprep.subr.bf16.mxu0 0
    %105 = vmatpush1.bf16.msra.mxu0 %v95
    %106 = vmatprep.subr.bf16.mxu0 0
    %107 = vmatpush1.bf16.msra.mxu0 %v94
    %108 = vmatprep.subr.bf16.mxu0 0
    %109 = vmatpush1.bf16.msra.mxu0 %v93
    %110 = vmatprep.subr.bf16.mxu0 0
    %111 = vmatpush1.bf16.msra.mxu0 %v92
    %112 = vmatprep.subr.bf16.mxu0 0
    %113 = vmatpush1.bf16.msra.mxu0 %v91
    %114 = vmatprep.subr.bf16.mxu0 0
    %115 = vmatpush1.bf16.msra.mxu0 %v90
    %116 = vmatprep.subr.bf16.mxu0 0
    %117 = vmatpush1.bf16.msra.mxu0 %v89
    %118 = vmatprep.subr.bf16.mxu0 0
    %119 = vmatpush1.bf16.msra.mxu0 %v88
    %120 = vmatprep.subr.bf16.mxu0 0
    %121 = vmatpush2.bf16.msra.mxu0 0
    %122 = vmatprep.subr.bf16.mxu0 0
    %123 = vmatpush2.bf16.msra.mxu0 0
    %124 = vmatprep.subr.bf16.mxu0 0
    %125 = vmatpush2.bf16.msra.mxu0 0
    %126 = vmatprep.subr.bf16.mxu0 0
    %127 = vmatpush2.bf16.msra.mxu0 0
    %128 = vmatprep.subr.bf16.mxu0 0
    %129 = vmatpush2.bf16.msra.mxu0 0
    %130 = vmatprep.subr.bf16.mxu0 0
    %131 = vmatpush2.bf16.msra.mxu0 0
    %132 = vmatprep.subr.bf16.mxu0 0
    %133 = vmatpush2.bf16.msra.mxu0 0
    %134 = vmatprep.subr.bf16.mxu0 0
    %135 = vmatpush2.bf16.msra.mxu0 0
    %136 = vmatprep.mubr.bf16.mxu0 0
    %137 = vmatmul.mubr.bf16.gmra.mxu0 %v54
    %v138 = vpop.f32.mrf.mxu0
    %v139 = vadd.f32 %v48, %v138
    %v140 = vpop.f32.mrf.mxu0
    %v141 = vpop.f32.mrf.mxu0
    %v142 = vadd.f32 %v48, %v141
    %v143 = vpop.f32.mrf.mxu0
    %144 = vdwg.mxu0
    %v145 = vld [vmem:[%s2] sm:$0xff]
    %v146 = vld [vmem:[%s2 + $0x8] sm:$0xff]
    %v147 = vadd.f32 %v139, %v145
    %v148 = vadd.f32 %v142, %v146
    %vm149 = vcmask 261120
    %v150 = vsel %vm149, %v147, 0.0
    %151 = vadd.xlane.f32.xlu0 %v150
    %v152 = vpop.xlane.xlu0 %151
    %v153 = vsel %vm149, %v148, 0.0
    %154 = vadd.xlane.f32.xlu0 %v153
    %v155 = vpop.xlane.xlu0 %154
    %v156 = vrcp.pop 32.0
    %v157 = vmul.f32 %v152, %v156
    %v158 = vmul.f32 %v155, %v156
    %v159 = vsub.f32 %v147, %v157
    %v160 = vsub.f32 %v148, %v158
    %v161 = vmul.f32 %v159, %v159
    %v162 = vmul.f32 %v160, %v160
    %v163 = vsel %vm149, %v161, 0.0
    %164 = vadd.xlane.f32.xlu0 %v163
    %v165 = vpop.xlane.xlu0 %164
    %v166 = vsel %vm149, %v162, 0.0
    %167 = vadd.xlane.f32.xlu0 %v166
    %v168 = vpop.xlane.xlu0 %167
    %v169 = vmul.f32 %v165, %v156
    %v170 = vmul.f32 %v168, %v156
    %v171 = vadd.f32 %v169, 1e-12
    %v172 = vadd.f32 %v170, 1e-12
    %v173 = vrsqrt.pop %v171
    %v174 = vrsqrt.pop %v172
    %v175 = vmul.f32 %v159, %v173
    %v176 = vmul.f32 %v160, %v174
    %v177 = vld [vmem:[%s4] sm:$0x1]
    %v179 = vlaneseq
    %v180 = vshrl.u32 %v179, 7
    %v181 = vsub.s32 0, %v180
    %v182 = vrot.slane %v177, %v181
    %v184 = vmul.f32 %v175, %v182
    %v185 = vmul.f32 %v176, %v182
    %v186 = vld [vmem:[%s5] sm:$0x1]
    %v188 = vlaneseq
    %v189 = vshrl.u32 %v188, 7
    %v190 = vsub.s32 0, %v189
    %v191 = vrot.slane %v186, %v190
    %v193 = vadd.f32 %v184, %v191
    %v194 = vadd.f32 %v185, %v191
    %195 = vst.msk [vmem:[#allocation2] sm:$0xff] %vm149, %v193
    %196 = vst.msk [vmem:[#allocation2 + $0x8] sm:$0xff] %vm149, %v194
    // Predicated region
    $region26: #{tpu_custom_call.1} parent=1 // pred_check
      _
    $region27: #{tpu_custom_call.1} parent=1 // pred_check_branch
      %198 = sbr.rel (0) target = $region29
    $region28: #{tpu_custom_call.1} parent=1 // pred_region
      %s200 = ssub.s32 256, 256
      %201 = vsyncadd [#allocation3], %s200
      %s202 = sshll.u32 [#allocation2], 4
      %s203 = int_to_ptr.vmem [resolvable:$true] %s202
      %208 = dma.vmem_to_hbm [thread:$0]  %s203, 256, %s6, [#allocation3], 128, 128, 8
    $region29: #{tpu_custom_call.1} parent=1 // pred_fallthru
      _
    // Predicated region
    $region30: #{tpu_custom_call.1} parent=1 // pred_check
      _
    $region31: #{tpu_custom_call.1} parent=1 // pred_check_branch
      %210 = sbr.rel (0) target = $region33
    $region32: #{tpu_custom_call.1} parent=1 // pred_region
      %211 = dma.done [#allocation3], 256
    $region33: #{tpu_custom_call.1} parent=1 // pred_fallthru
      _
    %212 = vsyncpa [#allocation3], 1

</llo_original>
